<compile_context>
chip_gen: v7x
topology: tpu7x:2x2x1
jax: 0.10.0
libtpu: 0.0.40
codegen_flags: <defaults>
</compile_context>

<pallas_src>
import jax
import jax.numpy as jnp
from jax.experimental import pallas as pl
from jax.experimental.pallas import tpu as pltpu


def linear_relu_kernel(x_ref, w_ref, b_ref, o_ref):
    # Fused hot path, all in VMEM: MXU matmul with f32 accumulation, then
    # bias-add + ReLU in f32 on the VPU (f32 epilogue is also the right choice
    # if activations/weights are stored in bf16 -- v5e has no bf16 VALU).
    y = jnp.dot(x_ref[...], w_ref[...], preferred_element_type=jnp.float32)
    y = y + b_ref[...].astype(jnp.float32)          # (1, N) broadcasts over rows
    o_ref[...] = jnp.maximum(y, 0.0).astype(o_ref.dtype)


def _round_up(v, m):
    return ((v + m - 1) // m) * m


def _build_call(M, K, N, tm, in_dtype, out_dtype, single_buffer_params):
    """Construct the pallas_call for one (M, K, N) problem."""

    def const_spec(shape):
        # Weight / bias never change across the grid (index_map is constant).
        if single_buffer_params:
            return pl.BlockSpec(shape, lambda i: (0, 0),
                                pipeline_mode=pl.Buffered(buffer_count=1))
        return pl.BlockSpec(shape, lambda i: (0, 0))

    itemsize = jnp.dtype(in_dtype).itemsize
    out_itemsize = jnp.dtype(out_dtype).itemsize

    # VMEM budget: x and out tiles are double-buffered by the pipeline; W/b are
    # resident (1 or 2 buffers depending on Buffered(1) support).
    wb_bufs = 1 if single_buffer_params else 2
    vmem_need = (2 * (tm * K) * itemsize
                 + 2 * (tm * N) * out_itemsize
                 + wb_bufs * (K * N + N) * itemsize)
    default_scoped = 32 * 1024 * 1024
    cp_kwargs = dict(dimension_semantics=("parallel",))
    if vmem_need > (3 * default_scoped) // 4:
        # Leave headroom; only needed for very large tm or large hidden sizes.
        cp_kwargs["vmem_limit_bytes"] = min(2 * vmem_need, 120 * 1024 * 1024)

    cost = pl.CostEstimate(
        flops=2 * M * K * N,
        transcendentals=0,
        bytes_accessed=itemsize * (M * K + K * N + N) + out_itemsize * M * N,
    )

    return pl.pallas_call(
        linear_relu_kernel,
        out_shape=jax.ShapeDtypeStruct((M, N), out_dtype),
        grid_spec=pl.GridSpec(
            grid=(pl.cdiv(M, tm),),
            in_specs=[
                pl.BlockSpec((tm, K), lambda i: (i, 0)),   # tall row tile of x
                const_spec((K, N)),                        # full weight, resident
                const_spec((1, N)),                        # bias, resident
            ],
            out_specs=pl.BlockSpec((tm, N), lambda i: (i, 0)),  # lane-dense (N % 128 == 0)
        ),
        compiler_params=pltpu.CompilerParams(**cp_kwargs),
        cost_estimate=cost,
    )


def mlp_forward(x, w, b, *, tm=512, compute_dtype=None):
    """Fused Linear + ReLU: max(x @ w + b, 0).

    x: (M, K), w: (K, N), b: (N,).  `compute_dtype=jnp.bfloat16` optionally halves
    HBM traffic for x/w storage (accumulation and epilogue stay f32).
    """
    M, K = x.shape
    K2, N = w.shape
    assert K == K2 and b.shape == (N,)
    assert N % 128 == 0, "tile N in multiples of 128 to keep output stores lane-dense"

    out_dtype = x.dtype
    if compute_dtype is not None:
        x = x.astype(compute_dtype)
        w = w.astype(compute_dtype)
    b2d = b.reshape(1, N).astype(jnp.float32)   # bias stays f32 for the f32 epilogue

    # Big-but-bounded row tile: amortizes the ~0.35us/step overhead and fills the
    # MXU, never exceeding the (sublane-rounded) problem size.  Multiple of 8 (f32).
    tm = max(8, min(tm, _round_up(M, 8)))

    last_err = None
    for single_buf in (True, False):
        try:
            call = _build_call(M, K, N, tm, x.dtype, out_dtype, single_buf)
            return call(x, w, b2d)
        except Exception as e:
            # pipeline_mode=pl.Buffered(1) not supported by this Pallas build ->
            # retry with default double-buffering (identical semantics).
            last_err = e
    raise last_err


def reference_forward(x, w, b):
    return jnp.maximum(x @ w + b[None, :], 0.0)


if __name__ == "__main__":
    # Shapes consistent with the module: input_dim=32, hidden_dim[0]=128.
    input_dim, hidden = 32, 128

    key = jax.random.PRNGKey(0)
    kx, kw, kb, kx2 = jax.random.split(key, 4)

    # Deterministic synthetic parameters in PyTorch layout (out, in); the kernel
    # consumes the transpose (in, out).
    w_pt = jax.random.normal(kw, (hidden, input_dim), dtype=jnp.float32) * 0.05
    b = jax.random.normal(kb, (hidden,), dtype=jnp.float32) * 0.05
    w = w_pt.T  # (input_dim, hidden)

    # Small batch (typical module usage): tm clamps to 8, grid of 1.
    x_small = jax.random.normal(kx, (8, input_dim), dtype=jnp.float32)
    out_small = jax.block_until_ready(mlp_forward(x_small, w, b))
    assert out_small.shape == (8, hidden)
    assert jnp.allclose(out_small, reference_forward(x_small, w, b),
                        atol=1e-5, rtol=1e-5), "mismatch vs reference (small batch)"

    # Taller batch exercising the 512-row tile, a grid of >1 steps (megacore
    # shardable), and the ragged tail block.
    x_tall = jax.random.normal(kx2, (1000, input_dim), dtype=jnp.float32)
    out_tall = jax.block_until_ready(mlp_forward(x_tall, w, b))
    assert out_tall.shape == (1000, hidden)
    assert jnp.allclose(out_tall, reference_forward(x_tall, w, b),
                        atol=1e-5, rtol=1e-5), "mismatch vs reference (tall batch)"

    print("KERNEL_OK")
</pallas_src>

<mosaic_0001>
module attributes {stable_mosaic.version = 11 : i64} {
  func.func @linear_relu_kernel(%arg0: i32, %arg1: memref<8x32xf32, #tpu.memory_space<vmem>>, %arg2: memref<32x128xf32, #tpu.memory_space<vmem>>, %arg3: memref<1x128xf32, #tpu.memory_space<vmem>>, %arg4: memref<8x128xf32, #tpu.memory_space<vmem>>) attributes {dimension_semantics = [#tpu.dimension_semantics<parallel>], iteration_bounds = array<i64: 1>, scalar_prefetch = 0 : i64, scratch_operands = 0 : i64, tpu.core_type = #tpu.core_type<tc>, window_params = [{transform_indices = @transform_0, window_bounds = array<i64: 8, 32>}, {pipeline_mode = #tpu.pipeline_mode<synchronous>, transform_indices = @transform_1, window_bounds = array<i64: 32, 128>}, {pipeline_mode = #tpu.pipeline_mode<synchronous>, transform_indices = @transform_2, window_bounds = array<i64: 1, 128>}, {transform_indices = @transform_3, window_bounds = array<i64: 8, 128>}]} {
    %c0 = arith.constant 0 : index
    %c0_0 = arith.constant 0 : index
    %0 = vector.load %arg1[%c0, %c0_0] : memref<8x32xf32, #tpu.memory_space<vmem>>, vector<8x32xf32>
    %c0_1 = arith.constant 0 : index
    %c0_2 = arith.constant 0 : index
    %1 = vector.load %arg2[%c0_1, %c0_2] : memref<32x128xf32, #tpu.memory_space<vmem>>, vector<32x128xf32>
    %cst = arith.constant dense<0.000000e+00> : vector<8x128xf32>
    %2 = tpu.matmul %0, %1, %cst {dimension_numbers = #tpu.dot_dimension_numbers<[1], [0], [0], [1], [0, 0, 1, 1], [], []>} : vector<8x32xf32>, vector<32x128xf32>, vector<8x128xf32> -> vector<8x128xf32>
    %c0_3 = arith.constant 0 : index
    %c0_4 = arith.constant 0 : index
    %3 = vector.load %arg3[%c0_3, %c0_4] : memref<1x128xf32, #tpu.memory_space<vmem>>, vector<1x128xf32>
    %4 = vector.broadcast %3 : vector<1x128xf32> to vector<8x128xf32>
    %5 = arith.addf %2, %4 : vector<8x128xf32>
    %cst_5 = arith.constant 0.000000e+00 : f32
    %6 = vector.broadcast %cst_5 : f32 to vector<8x128xf32>
    %7 = arith.maximumf %5, %6 : vector<8x128xf32>
    %c0_6 = arith.constant 0 : index
    %c0_7 = arith.constant 0 : index
    %8 = vector.load %arg4[%c0_6, %c0_7] : memref<8x128xf32, #tpu.memory_space<vmem>>, vector<8x128xf32>
    tpu.vector_store %arg4[%c0_6, %c0_7], %7 {strides = array<i32>} : memref<8x128xf32, #tpu.memory_space<vmem>>, vector<8x128xf32>,
    return
  }
  func.func @transform_0(%arg0: i32) -> (i32, i32) {
    %c0_i32 = arith.constant 0 : i32
    %c0_i32_0 = arith.constant 0 : i32
    return %arg0, %c0_i32 : i32, i32
  }
  func.func @transform_1(%arg0: i32) -> (i32, i32) {
    %c0_i32 = arith.constant 0 : i32
    %c0_i32_0 = arith.constant 0 : i32
    %c0_i32_1 = arith.constant 0 : i32
    return %c0_i32, %c0_i32_0 : i32, i32
  }
  func.func @transform_2(%arg0: i32) -> (i32, i32) {
    %c0_i32 = arith.constant 0 : i32
    %c0_i32_0 = arith.constant 0 : i32
    %c0_i32_1 = arith.constant 0 : i32
    return %c0_i32, %c0_i32_0 : i32, i32
  }
  func.func @transform_3(%arg0: i32) -> (i32, i32) {
    %c0_i32 = arith.constant 0 : i32
    %c0_i32_0 = arith.constant 0 : i32
    return %arg0, %c0_i32 : i32, i32
  }
}

module attributes {stable_mosaic.version = 11 : i64} {
  func.func @linear_relu_kernel(%arg0: i32, %arg1: memref<8x32xf32, #tpu.memory_space<vmem>>, %arg2: memref<32x128xf32, #tpu.memory_space<vmem>>, %arg3: memref<1x128xf32, #tpu.memory_space<vmem>>, %arg4: memref<8x128xf32, #tpu.memory_space<vmem>>) attributes {dimension_semantics = [#tpu.dimension_semantics<parallel>], iteration_bounds = array<i64: 1>, scalar_prefetch = 0 : i64, scratch_operands = 0 : i64, tpu.core_type = #tpu.core_type<tc>, window_params = [{transform_indices = @transform_0, window_bounds = array<i64: 8, 32>}, {pipeline_mode = #tpu.pipeline_mode<synchronous>, transform_indices = @transform_1, window_bounds = array<i64: 32, 128>}, {pipeline_mode = #tpu.pipeline_mode<synchronous>, transform_indices = @transform_2, window_bounds = array<i64: 1, 128>}, {transform_indices = @transform_3, window_bounds = array<i64: 8, 128>}]} {
    %c0 = arith.constant 0 : index
    %c0_0 = arith.constant 0 : index
    %0 = vector.load %arg1[%c0, %c0_0] : memref<8x32xf32, #tpu.memory_space<vmem>>, vector<8x32xf32>
    %c0_1 = arith.constant 0 : index
    %c0_2 = arith.constant 0 : index
    %1 = vector.load %arg2[%c0_1, %c0_2] : memref<32x128xf32, #tpu.memory_space<vmem>>, vector<32x128xf32>
    %cst = arith.constant dense<0.000000e+00> : vector<8x128xf32>
    %2 = tpu.matmul %0, %1, %cst {dimension_numbers = #tpu.dot_dimension_numbers<[1], [0], [0], [1], [0, 0, 1, 1], [], []>} : vector<8x32xf32>, vector<32x128xf32>, vector<8x128xf32> -> vector<8x128xf32>
    %c0_3 = arith.constant 0 : index
    %c0_4 = arith.constant 0 : index
    %3 = vector.load %arg3[%c0_3, %c0_4] : memref<1x128xf32, #tpu.memory_space<vmem>>, vector<1x128xf32>
    %4 = vector.broadcast %3 : vector<1x128xf32> to vector<8x128xf32>
    %5 = arith.addf %2, %4 : vector<8x128xf32>
    %cst_5 = arith.constant 0.000000e+00 : f32
    %6 = vector.broadcast %cst_5 : f32 to vector<8x128xf32>
    %7 = arith.maximumf %5, %6 : vector<8x128xf32>
    %c0_6 = arith.constant 0 : index
    %c0_7 = arith.constant 0 : index
    %8 = vector.load %arg4[%c0_6, %c0_7] : memref<8x128xf32, #tpu.memory_space<vmem>>, vector<8x128xf32>
    tpu.vector_store %arg4[%c0_6, %c0_7], %7 {strides = array<i32>} : memref<8x128xf32, #tpu.memory_space<vmem>>, vector<8x128xf32>,
    return
  }
  func.func @transform_0(%arg0: i32) -> (i32, i32) {
    %c0_i32 = arith.constant 0 : i32
    %c0_i32_0 = arith.constant 0 : i32
    return %arg0, %c0_i32 : i32, i32
  }
  func.func @transform_1(%arg0: i32) -> (i32, i32) {
    %c0_i32 = arith.constant 0 : i32
    %c0_i32_0 = arith.constant 0 : i32
    %c0_i32_1 = arith.constant 0 : i32
    return %c0_i32, %c0_i32_0 : i32, i32
  }
  func.func @transform_2(%arg0: i32) -> (i32, i32) {
    %c0_i32 = arith.constant 0 : i32
    %c0_i32_0 = arith.constant 0 : i32
    %c0_i32_1 = arith.constant 0 : i32
    return %c0_i32, %c0_i32_0 : i32, i32
  }
  func.func @transform_3(%arg0: i32) -> (i32, i32) {
    %c0_i32 = arith.constant 0 : i32
    %c0_i32_0 = arith.constant 0 : i32
    return %arg0, %c0_i32 : i32, i32
  }
}

</mosaic_0001>

<llo_original>
// kernel: tpu_custom_call.1
$region0: #{tpu_custom_call.1}
  #allocation0 [shape = 'u32[]', space=smem, size = 0x4, offset = 0x4, fixed_abs, tag = 'smem constant byte address 0x4 - core index']
  #allocation1 [shape = 'u32[144,128]{1,0:T(1,128)}', space=vmem, size = 0x12000, scoped, tag = 'internal scratch']
  %s0 = inlined_call_operand.hbm [shape: f32[8,32], index: 0, kind: input, shape index: {}]
  %s1 = inlined_call_operand.hbm [shape: f32[32,128], index: 1, kind: input, shape index: {}]
  %s2 = inlined_call_operand.vmem [shape: f32[1,128], index: 2, kind: input, shape index: {}]
  %s3 = inlined_call_operand.hbm [shape: f32[8,128], index: 3, kind: output, shape index: {}]
  %s4 = sld [smem:[#allocation0]]
  $region30: #{tpu_custom_call.1} parent=0
    _
  %s6 = ssub.s32 1, %s4
  %s7 = scalar_select 0, %s6, %s4
  $region1: #{tpu_custom_call.1} parent=0
    #allocation2 [shape = 'u8[4096]{0}', space=vmem, size = 0x1000, scoped, tag = 'input window, operand 0, single buffered']
    #allocation3 [shape = 's32[1]{0}', space=sflag, size = 0x4, scoped, tag = 'scoped memory for tpu_custom_call.1']
    #allocation4 [shape = 's32[1]{0}', space=sflag, size = 0x4, scoped, tag = 'scoped memory for tpu_custom_call.1']
    #allocation5 [shape = 'u8[16384]{0}', space=vmem, size = 0x4000, scoped, tag = 'input window, operand 1, single buffered']
    #allocation6 [shape = 's32[1]{0}', space=sflag, size = 0x4, scoped, tag = 'scoped memory for tpu_custom_call.1']
    #allocation7 [shape = 'u8[4096]{0}', space=vmem, size = 0x1000, scoped, tag = 'output window, operand 0, single buffered']
    %8 = vsyncpa [#allocation3], 0
    %9 = vsyncpa [#allocation6], 0
    %10 = vsyncpa [#allocation4], 0
    // Predicated region
    $region2: #{tpu_custom_call.1} parent=1 // pred_check
      _
    $region3: #{tpu_custom_call.1} parent=1 // pred_check_branch
      %12 = sbr.rel (0) target = $region5
    $region4: #{tpu_custom_call.1} parent=1 // pred_region
      %s14 = ssub.s32 128, 128
      %15 = vsyncadd [#allocation3], %s14
      %s17 = sshll.u32 [#allocation2], 4
      %s18 = int_to_ptr.vmem [resolvable:$true] %s17
      %20 = dma.hbm_to_vmem [thread:$0]  %s0, 128, %s18, [#allocation3]
    $region5: #{tpu_custom_call.1} parent=1 // pred_fallthru
      _
    // Predicated region
    $region6: #{tpu_custom_call.1} parent=1 // pred_check
      _
    $region7: #{tpu_custom_call.1} parent=1 // pred_check_branch
      %22 = sbr.rel (0) target = $region9
    $region8: #{tpu_custom_call.1} parent=1 // pred_region
      %s24 = ssub.s32 512, 512
      %25 = vsyncadd [#allocation6], %s24
      %s26 = sshll.u32 [#allocation5], 4
      %s27 = int_to_ptr.vmem [resolvable:$true] %s26
      %32 = dma.hbm_to_vmem [thread:$0]  %s1, 512, %s27, [#allocation6], 128, 128, 8
    $region9: #{tpu_custom_call.1} parent=1 // pred_fallthru
      _
    // Predicated region
    $region10: #{tpu_custom_call.1} parent=1 // pred_check
      _
    $region11: #{tpu_custom_call.1} parent=1 // pred_check_branch
      %34 = sbr.rel (0) target = $region13
    $region12: #{tpu_custom_call.1} parent=1 // pred_region
      _
    $region13: #{tpu_custom_call.1} parent=1 // pred_fallthru
      _
    // Predicated region
    $region14: #{tpu_custom_call.1} parent=1 // pred_check
      _
    $region15: #{tpu_custom_call.1} parent=1 // pred_check_branch
      %36 = sbr.rel (0) target = $region17
    $region16: #{tpu_custom_call.1} parent=1 // pred_region
      %37 = dma.done [#allocation3], 128
    $region17: #{tpu_custom_call.1} parent=1 // pred_fallthru
      _
    // Predicated region
    $region18: #{tpu_custom_call.1} parent=1 // pred_check
      _
    $region19: #{tpu_custom_call.1} parent=1 // pred_check_branch
      %39 = sbr.rel (0) target = $region21
    $region20: #{tpu_custom_call.1} parent=1 // pred_region
      %40 = dma.done [#allocation6], 512
    $region21: #{tpu_custom_call.1} parent=1 // pred_fallthru
      _
    %v41 = vld [vmem:[#allocation2] sm:$0xff]
    %v42 = vld [vmem:[#allocation5] sm:$0xff]
    %v43 = vld [vmem:[#allocation5 + $0x8] sm:$0xff]
    %v44 = vld [vmem:[#allocation5 + $0x10] sm:$0xff]
    %v45 = vld [vmem:[#allocation5 + $0x18] sm:$0xff]
    %v46 = vld [vmem:[%s2] sm:$0x1]
    %v48 = vlaneseq
    %v49 = vshrl.u32 %v48, 7
    %v50 = vsub.s32 0, %v49
    %v51 = vrot.slane %v46, %v50
    %vm53 = vcmask 261120
    %v55 = vsel %vm53, %v41, 0
    %57 = vmatprep.subr.mxu0 0.0
    %58 = vmatpush1.msra.mxu0 %v42
    %59 = vmatprep.subr.mxu0 0.0
    %60 = vmatpush1.msra.mxu0 %v43
    %61 = vmatprep.subr.mxu0 0.0
    %62 = vmatpush1.msra.mxu0 %v44
    %63 = vmatprep.subr.mxu0 0.0
    %64 = vmatpush1.msra.mxu0 %v45
    %65 = vmatprep.subr.mxu0 0.0
    %66 = vmatpush1.msra.mxu0 0.0
    %67 = vmatprep.subr.mxu0 0.0
    %68 = vmatpush1.msra.mxu0 0.0
    %69 = vmatprep.subr.mxu0 0.0
    %70 = vmatpush1.msra.mxu0 0.0
    %71 = vmatprep.subr.mxu0 0.0
    %72 = vmatpush1.msra.mxu0 0.0
    %73 = vmatprep.subr.mxu0 0.0
    %74 = vmatpush1.msra.mxu0 0.0
    %75 = vmatprep.subr.mxu0 0.0
    %76 = vmatpush1.msra.mxu0 0.0
    %77 = vmatprep.subr.mxu0 0.0
    %78 = vmatpush1.msra.mxu0 0.0
    %79 = vmatprep.subr.mxu0 0.0
    %80 = vmatpush1.msra.mxu0 0.0
    %81 = vmatprep.subr.mxu0 0.0
    %82 = vmatpush1.msra.mxu0 0.0
    %83 = vmatprep.subr.mxu0 0.0
    %84 = vmatpush1.msra.mxu0 0.0
    %85 = vmatprep.subr.mxu0 0.0
    %86 = vmatpush1.msra.mxu0 0.0
    %87 = vmatprep.subr.mxu0 0.0
    %88 = vmatpush1.msra.mxu0 0.0
    %89 = vmatprep.subr.mxu0 0.0
    %90 = vmatpush1.msra.mxu0 0.0
    %91 = vmatprep.subr.mxu0 0.0
    %92 = vmatpush1.msra.mxu0 0.0
    %93 = vmatprep.subr.mxu0 0.0
    %94 = vmatpush1.msra.mxu0 0.0
    %95 = vmatprep.subr.mxu0 0.0
    %96 = vmatpush1.msra.mxu0 0.0
    %97 = vmatprep.subr.mxu0 0.0
    %98 = vmatpush1.msra.mxu0 0.0
    %99 = vmatprep.subr.mxu0 0.0
    %100 = vmatpush1.msra.mxu0 0.0
    %101 = vmatprep.subr.mxu0 0.0
    %102 = vmatpush1.msra.mxu0 0.0
    %103 = vmatprep.subr.mxu0 0.0
    %104 = vmatpush1.msra.mxu0 0.0
    %105 = vmatprep.subr.mxu0 0.0
    %106 = vmatpush1.msra.mxu0 0.0
    %107 = vmatprep.subr.mxu0 0.0
    %108 = vmatpush1.msra.mxu0 0.0
    %109 = vmatprep.subr.mxu0 0.0
    %110 = vmatpush1.msra.mxu0 0.0
    %111 = vmatprep.subr.mxu0 0.0
    %112 = vmatpush1.msra.mxu0 0.0
    %113 = vmatprep.subr.mxu0 0.0
    %114 = vmatpush1.msra.mxu0 0.0
    %115 = vmatprep.subr.mxu0 0.0
    %116 = vmatpush1.msra.mxu0 0.0
    %117 = vmatprep.subr.mxu0 0.0
    %118 = vmatpush1.msra.mxu0 0.0
    %119 = vmatprep.subr.mxu0 0.0
    %120 = vmatpush1.msra.mxu0 0.0
    %121 = vmatprep.mubr.f32.mxu0 0.0
    %122 = vmatmul.mubr.f32.gmra.mrb[0].mxu0 %v55
    %v123 = vpop.f32.mrb[0].mxu0
    %v124 = vadd.f32 %v51, %v123
    %v125 = vpop.f32.mrb[0].mxu0
    %126 = vdwg.mxu0
    %v127 = vmax.f32 %v124, 0.0
    %128 = vst [vmem:[#allocation7] sm:$0xff] %v127
    // Predicated region
    $region22: #{tpu_custom_call.1} parent=1 // pred_check
      _
    $region23: #{tpu_custom_call.1} parent=1 // pred_check_branch
      %130 = sbr.rel (0) target = $region25
    $region24: #{tpu_custom_call.1} parent=1 // pred_region
      %s132 = ssub.s32 128, 128
      %133 = vsyncadd [#allocation4], %s132
      %s135 = sshll.u32 [#allocation7], 4
      %s136 = int_to_ptr.vmem [resolvable:$true] %s135
      %138 = dma.vmem_to_hbm [thread:$0]  %s136, 128, %s3, [#allocation4]
    $region25: #{tpu_custom_call.1} parent=1 // pred_fallthru
      _
    // Predicated region
    $region26: #{tpu_custom_call.1} parent=1 // pred_check
      _
    $region27: #{tpu_custom_call.1} parent=1 // pred_check_branch
      %140 = sbr.rel (0) target = $region29
    $region28: #{tpu_custom_call.1} parent=1 // pred_region
      %141 = dma.done [#allocation4], 128
    $region29: #{tpu_custom_call.1} parent=1 // pred_fallthru
      _
    %142 = vsyncpa [#allocation3], 1
    %143 = vsyncpa [#allocation6], 1
    %144 = vsyncpa [#allocation4], 1

// kernel: tpu_custom_call.1
$region0: #{tpu_custom_call.1}
  #allocation0 [shape = 'u32[]', space=smem, size = 0x4, offset = 0x4, fixed_abs, tag = 'smem constant byte address 0x4 - core index']
  #allocation1 [shape = 'u32[144,128]{1,0:T(1,128)}', space=vmem, size = 0x12000, scoped, tag = 'internal scratch']
  %s0 = inlined_call_operand.hbm [shape: f32[8,32], index: 0, kind: input, shape index: {}]
  %s1 = inlined_call_operand.hbm [shape: f32[32,128], index: 1, kind: input, shape index: {}]
  %s2 = inlined_call_operand.vmem [shape: f32[1,128], index: 2, kind: input, shape index: {}]
  %s3 = inlined_call_operand.hbm [shape: f32[8,128], index: 3, kind: output, shape index: {}]
  %s4 = sld [smem:[#allocation0]]
  $region30: #{tpu_custom_call.1} parent=0
    _
  %s6 = ssub.s32 1, %s4
  %s7 = scalar_select 0, %s6, %s4
  $region1: #{tpu_custom_call.1} parent=0
    #allocation2 [shape = 'u8[4096]{0}', space=vmem, size = 0x1000, scoped, tag = 'input window, operand 0, single buffered']
    #allocation3 [shape = 's32[1]{0}', space=sflag, size = 0x4, scoped, tag = 'scoped memory for tpu_custom_call.1']
    #allocation4 [shape = 's32[1]{0}', space=sflag, size = 0x4, scoped, tag = 'scoped memory for tpu_custom_call.1']
    #allocation5 [shape = 'u8[16384]{0}', space=vmem, size = 0x4000, scoped, tag = 'input window, operand 1, single buffered']
    #allocation6 [shape = 's32[1]{0}', space=sflag, size = 0x4, scoped, tag = 'scoped memory for tpu_custom_call.1']
    #allocation7 [shape = 'u8[4096]{0}', space=vmem, size = 0x1000, scoped, tag = 'output window, operand 0, single buffered']
    %8 = vsyncpa [#allocation3], 0
    %9 = vsyncpa [#allocation6], 0
    %10 = vsyncpa [#allocation4], 0
    // Predicated region
    $region2: #{tpu_custom_call.1} parent=1 // pred_check
      _
    $region3: #{tpu_custom_call.1} parent=1 // pred_check_branch
      %12 = sbr.rel (0) target = $region5
    $region4: #{tpu_custom_call.1} parent=1 // pred_region
      %s14 = ssub.s32 128, 128
      %15 = vsyncadd [#allocation3], %s14
      %s17 = sshll.u32 [#allocation2], 4
      %s18 = int_to_ptr.vmem [resolvable:$true] %s17
      %20 = dma.hbm_to_vmem [thread:$0]  %s0, 128, %s18, [#allocation3]
    $region5: #{tpu_custom_call.1} parent=1 // pred_fallthru
      _
    // Predicated region
    $region6: #{tpu_custom_call.1} parent=1 // pred_check
      _
    $region7: #{tpu_custom_call.1} parent=1 // pred_check_branch
      %22 = sbr.rel (0) target = $region9
    $region8: #{tpu_custom_call.1} parent=1 // pred_region
      %s24 = ssub.s32 512, 512
      %25 = vsyncadd [#allocation6], %s24
      %s26 = sshll.u32 [#allocation5], 4
      %s27 = int_to_ptr.vmem [resolvable:$true] %s26
      %32 = dma.hbm_to_vmem [thread:$0]  %s1, 512, %s27, [#allocation6], 128, 128, 8
    $region9: #{tpu_custom_call.1} parent=1 // pred_fallthru
      _
    // Predicated region
    $region10: #{tpu_custom_call.1} parent=1 // pred_check
      _
    $region11: #{tpu_custom_call.1} parent=1 // pred_check_branch
      %34 = sbr.rel (0) target = $region13
    $region12: #{tpu_custom_call.1} parent=1 // pred_region
      _
    $region13: #{tpu_custom_call.1} parent=1 // pred_fallthru
      _
    // Predicated region
    $region14: #{tpu_custom_call.1} parent=1 // pred_check
      _
    $region15: #{tpu_custom_call.1} parent=1 // pred_check_branch
      %36 = sbr.rel (0) target = $region17
    $region16: #{tpu_custom_call.1} parent=1 // pred_region
      %37 = dma.done [#allocation3], 128
    $region17: #{tpu_custom_call.1} parent=1 // pred_fallthru
      _
    // Predicated region
    $region18: #{tpu_custom_call.1} parent=1 // pred_check
      _
    $region19: #{tpu_custom_call.1} parent=1 // pred_check_branch
      %39 = sbr.rel (0) target = $region21
    $region20: #{tpu_custom_call.1} parent=1 // pred_region
      %40 = dma.done [#allocation6], 512
    $region21: #{tpu_custom_call.1} parent=1 // pred_fallthru
      _
    %v41 = vld [vmem:[#allocation2] sm:$0xff]
    %v42 = vld [vmem:[#allocation5] sm:$0xff]
    %v43 = vld [vmem:[#allocation5 + $0x8] sm:$0xff]
    %v44 = vld [vmem:[#allocation5 + $0x10] sm:$0xff]
    %v45 = vld [vmem:[#allocation5 + $0x18] sm:$0xff]
    %v46 = vld [vmem:[%s2] sm:$0x1]
    %v48 = vlaneseq
    %v49 = vshrl.u32 %v48, 7
    %v50 = vsub.s32 0, %v49
    %v51 = vrot.slane %v46, %v50
    %vm53 = vcmask 261120
    %v55 = vsel %vm53, %v41, 0
    %57 = vmatprep.subr.mxu0 0.0
    %58 = vmatpush1.msra.mxu0 %v42
    %59 = vmatprep.subr.mxu0 0.0
    %60 = vmatpush1.msra.mxu0 %v43
    %61 = vmatprep.subr.mxu0 0.0
    %62 = vmatpush1.msra.mxu0 %v44
    %63 = vmatprep.subr.mxu0 0.0
    %64 = vmatpush1.msra.mxu0 %v45
    %65 = vmatprep.subr.mxu0 0.0
    %66 = vmatpush1.msra.mxu0 0.0
    %67 = vmatprep.subr.mxu0 0.0
    %68 = vmatpush1.msra.mxu0 0.0
    %69 = vmatprep.subr.mxu0 0.0
    %70 = vmatpush1.msra.mxu0 0.0
    %71 = vmatprep.subr.mxu0 0.0
    %72 = vmatpush1.msra.mxu0 0.0
    %73 = vmatprep.subr.mxu0 0.0
    %74 = vmatpush1.msra.mxu0 0.0
    %75 = vmatprep.subr.mxu0 0.0
    %76 = vmatpush1.msra.mxu0 0.0
    %77 = vmatprep.subr.mxu0 0.0
    %78 = vmatpush1.msra.mxu0 0.0
    %79 = vmatprep.subr.mxu0 0.0
    %80 = vmatpush1.msra.mxu0 0.0
    %81 = vmatprep.subr.mxu0 0.0
    %82 = vmatpush1.msra.mxu0 0.0
    %83 = vmatprep.subr.mxu0 0.0
    %84 = vmatpush1.msra.mxu0 0.0
    %85 = vmatprep.subr.mxu0 0.0
    %86 = vmatpush1.msra.mxu0 0.0
    %87 = vmatprep.subr.mxu0 0.0
    %88 = vmatpush1.msra.mxu0 0.0
    %89 = vmatprep.subr.mxu0 0.0
    %90 = vmatpush1.msra.mxu0 0.0
    %91 = vmatprep.subr.mxu0 0.0
    %92 = vmatpush1.msra.mxu0 0.0
    %93 = vmatprep.subr.mxu0 0.0
    %94 = vmatpush1.msra.mxu0 0.0
    %95 = vmatprep.subr.mxu0 0.0
    %96 = vmatpush1.msra.mxu0 0.0
    %97 = vmatprep.subr.mxu0 0.0
    %98 = vmatpush1.msra.mxu0 0.0
    %99 = vmatprep.subr.mxu0 0.0
    %100 = vmatpush1.msra.mxu0 0.0
    %101 = vmatprep.subr.mxu0 0.0
    %102 = vmatpush1.msra.mxu0 0.0
    %103 = vmatprep.subr.mxu0 0.0
    %104 = vmatpush1.msra.mxu0 0.0
    %105 = vmatprep.subr.mxu0 0.0
    %106 = vmatpush1.msra.mxu0 0.0
    %107 = vmatprep.subr.mxu0 0.0
    %108 = vmatpush1.msra.mxu0 0.0
    %109 = vmatprep.subr.mxu0 0.0
    %110 = vmatpush1.msra.mxu0 0.0
    %111 = vmatprep.subr.mxu0 0.0
    %112 = vmatpush1.msra.mxu0 0.0
    %113 = vmatprep.subr.mxu0 0.0
    %114 = vmatpush1.msra.mxu0 0.0
    %115 = vmatprep.subr.mxu0 0.0
    %116 = vmatpush1.msra.mxu0 0.0
    %117 = vmatprep.subr.mxu0 0.0
    %118 = vmatpush1.msra.mxu0 0.0
    %119 = vmatprep.subr.mxu0 0.0
    %120 = vmatpush1.msra.mxu0 0.0
    %121 = vmatprep.mubr.f32.mxu0 0.0
    %122 = vmatmul.mubr.f32.gmra.mrb[0].mxu0 %v55
    %v123 = vpop.f32.mrb[0].mxu0
    %v124 = vadd.f32 %v51, %v123
    %v125 = vpop.f32.mrb[0].mxu0
    %126 = vdwg.mxu0
    %v127 = vmax.f32 %v124, 0.0
    %128 = vst [vmem:[#allocation7] sm:$0xff] %v127
    // Predicated region
    $region22: #{tpu_custom_call.1} parent=1 // pred_check
      _
    $region23: #{tpu_custom_call.1} parent=1 // pred_check_branch
      %130 = sbr.rel (0) target = $region25
    $region24: #{tpu_custom_call.1} parent=1 // pred_region
      %s132 = ssub.s32 128, 128
      %133 = vsyncadd [#allocation4], %s132
      %s135 = sshll.u32 [#allocation7], 4
      %s136 = int_to_ptr.vmem [resolvable:$true] %s135
      %138 = dma.vmem_to_hbm [thread:$0]  %s136, 128, %s3, [#allocation4]
    $region25: #{tpu_custom_call.1} parent=1 // pred_fallthru
      _
    // Predicated region
    $region26: #{tpu_custom_call.1} parent=1 // pred_check
      _
    $region27: #{tpu_custom_call.1} parent=1 // pred_check_branch
      %140 = sbr.rel (0) target = $region29
    $region28: #{tpu_custom_call.1} parent=1 // pred_region
      %141 = dma.done [#allocation4], 128
    $region29: #{tpu_custom_call.1} parent=1 // pred_fallthru
      _
    %142 = vsyncpa [#allocation3], 1
    %143 = vsyncpa [#allocation6], 1
    %144 = vsyncpa [#allocation4], 1

</llo_original>
